<compile_context>
chip_gen: v5e
topology: v5e:2x2
jax: 0.10.0
libtpu: 0.0.40
codegen_flags: <defaults>
</compile_context>

<pallas_src>
import jax
import jax.numpy as jnp
from jax.experimental import pallas as pl
from jax.experimental.pallas import tpu as pltpu


def _round_up(n, m):
    return ((n + m - 1) // m) * m


def critic_kernel(x_ref, a_ref, w1_ref, b1_ref,
                  w2s_ref, w2a_ref, b2_ref,
                  w3_ref, b3_ref, out_ref):
    # fc1 + relu: MXU matmul with f32 accumulation; bias add / relu in f32 on the VPU.
    h1 = jnp.dot(x_ref[...], w1_ref[...], preferred_element_type=jnp.float32)
    h1 = jnp.maximum(h1 + b1_ref[...], 0.0)

    # fc2 on concat([h1, a], 1), realized as a split:
    #   concat([h1, a]) @ W2 == h1 @ W2[:hidden1] + a @ W2[hidden1:]
    # Main K=hidden1 term on the MXU; the tiny K=nb_actions term is a VPU
    # broadcast multiply-accumulate (avoids a serialized near-empty MXU pass).
    h2 = jnp.dot(h1, w2s_ref[...], preferred_element_type=jnp.float32) + b2_ref[...]
    act = a_ref[...]
    nb_actions = act.shape[1]
    if nb_actions <= 8:
        for k in range(nb_actions):
            h2 = h2 + act[:, k:k + 1] * w2a_ref[k:k + 1, :]
    else:
        h2 = h2 + jnp.dot(act, w2a_ref[...], preferred_element_type=jnp.float32)
    h2 = jnp.maximum(h2, 0.0)

    # fc3 (out_features = 1): lane reduction instead of an N=1 MXU matmul.
    out = jnp.sum(h2 * w3_ref[...], axis=-1, keepdims=True) + b3_ref[0]
    out_ref[...] = out.astype(out_ref.dtype)


def critic_forward(x, a, params, tile_b=None):
    """x: (B, nb_states) f32, a: (B, nb_actions) f32 -> (B, 1) f32."""
    w1, b1, w2s, w2a, b2, w3_row, b3 = params
    B, nb_states = x.shape
    nb_actions = a.shape[1]
    hidden1 = w1.shape[1]
    hidden2 = w2s.shape[1]

    if tile_b is None:
        # Large batch tiles amortize per-grid-step overhead (~0.35us) while the
        # double-buffered activation tiles stay tiny relative to VMEM.
        tile_b = min(512, max(8, _round_up(B, 8)))
    tile_b = _round_up(tile_b, 8)

    b_pad = _round_up(B, tile_b)
    if b_pad != B:
        # Pad the batch so every grid step is a full tile (no OOB reads/writes).
        x = jnp.pad(x, ((0, b_pad - B), (0, 0)))
        a = jnp.pad(a, ((0, b_pad - B), (0, 0)))
    grid = (b_pad // tile_b,)

    const = lambda i: (0, 0)  # weights/biases: resident across all grid steps
    out = pl.pallas_call(
        critic_kernel,
        out_shape=jax.ShapeDtypeStruct((b_pad, 1), jnp.float32),
        grid=grid,
        in_specs=[
            pl.BlockSpec((tile_b, nb_states), lambda i: (i, 0)),   # x (pipelined)
            pl.BlockSpec((tile_b, nb_actions), lambda i: (i, 0)),  # a (pipelined)
            pl.BlockSpec((nb_states, hidden1), const),             # W1
            pl.BlockSpec((1, hidden1), const),                     # b1
            pl.BlockSpec((hidden1, hidden2), const),               # W2 (state part)
            pl.BlockSpec((nb_actions, hidden2), const),            # W2 (action part)
            pl.BlockSpec((1, hidden2), const),                     # b2
            pl.BlockSpec((1, hidden2), const),                     # W3 as a (1, hidden2) row
            pl.BlockSpec(memory_space=pltpu.SMEM),                 # b3 scalar in SMEM
        ],
        out_specs=pl.BlockSpec((tile_b, 1), lambda i: (i, 0)),
        compiler_params=pltpu.CompilerParams(
            dimension_semantics=("parallel",)),                    # 2 TCs on v7x
    )(x, a, w1, b1, w2s, w2a, b2, w3_row, b3)

    return out[:B] if b_pad != B else out


def init_critic_params(key, nb_states, nb_actions, hidden1, hidden2,
                       init_w=0.003):
    """Deterministic init mirroring the PyTorch module's init_weights.

    fanin_init uses v = 1/sqrt(size[0]) where size = (out_features, in_features),
    i.e. v = 1/sqrt(out_features) — reproduced faithfully from the reference repo.
    Biases use PyTorch Linear's default uniform(-1/sqrt(fan_in), 1/sqrt(fan_in)).
    Weights are stored pre-transposed to (in, out); W2 is stored split into its
    state (hidden1 rows) and action (nb_actions rows) parts; W3 as a row vector.
    """
    ks = jax.random.split(key, 6)

    def uni(k, shape, bound):
        return jax.random.uniform(k, shape, jnp.float32, -bound, bound)

    v1 = 1.0 / (hidden1 ** 0.5)                   # fanin_init on (hidden1, nb_states)
    w1 = uni(ks[0], (nb_states, hidden1), v1)
    b1 = uni(ks[1], (1, hidden1), 1.0 / (nb_states ** 0.5))

    v2 = 1.0 / (hidden2 ** 0.5)                   # fanin_init on (hidden2, hidden1+nb_actions)
    w2_full = uni(ks[2], (hidden1 + nb_actions, hidden2), v2)
    w2s = w2_full[:hidden1, :]                    # state-hidden part of the concat
    w2a = w2_full[hidden1:, :]                    # action part of the concat
    b2 = uni(ks[3], (1, hidden2), 1.0 / ((hidden1 + nb_actions) ** 0.5))

    w3_row = uni(ks[4], (1, hidden2), init_w)     # fc3 weight as a row
    b3 = uni(ks[5], (1,), 1.0 / (hidden2 ** 0.5)) # scalar bias (lives in SMEM)

    return (w1, b1, w2s, w2a, b2, w3_row, b3)


def critic_ref(x, a, params):
    """Pure-JAX reference (same math as the PyTorch forward)."""
    w1, b1, w2s, w2a, b2, w3_row, b3 = params
    h1 = jnp.maximum(x @ w1 + b1, 0.0)
    h2 = jnp.maximum(h1 @ w2s + a @ w2a + b2, 0.0)
    return jnp.sum(h2 * w3_row, axis=-1, keepdims=True) + b3


if __name__ == "__main__":
    # Small shapes consistent with the module's forward.
    B, nb_states, nb_actions = 2, 16, 4
    hidden1, hidden2 = 32, 32

    key = jax.random.PRNGKey(0)
    kx, ka, kp = jax.random.split(key, 3)
    x = jax.random.normal(kx, (B, nb_states), jnp.float32)
    a = jax.random.normal(ka, (B, nb_actions), jnp.float32)
    params = init_critic_params(kp, nb_states, nb_actions, hidden1, hidden2)

    out = jax.block_until_ready(critic_forward(x, a, params))
    ref = critic_ref(x, a, params)
    assert out.shape == (B, 1), out.shape
    assert jnp.allclose(out, ref, atol=1e-5, rtol=1e-5), (out, ref)

    # Exercise the multi-tile grid + padded-batch path as well.
    B2 = 1000
    kx2, ka2 = jax.random.split(jax.random.PRNGKey(1), 2)
    x2 = jax.random.normal(kx2, (B2, nb_states), jnp.float32)
    a2 = jax.random.normal(ka2, (B2, nb_actions), jnp.float32)
    out2 = jax.block_until_ready(critic_forward(x2, a2, params, tile_b=256))
    ref2 = critic_ref(x2, a2, params)
    assert out2.shape == (B2, 1), out2.shape
    assert jnp.allclose(out2, ref2, atol=1e-4, rtol=1e-4), "mismatch on tiled batch"

    print("KERNEL_OK")
</pallas_src>

<mosaic_0001>
module attributes {stable_mosaic.version = 11 : i64} {
  func.func @critic_kernel(%arg0: i32, %arg1: memref<8x16xf32, #tpu.memory_space<vmem>>, %arg2: memref<8x4xf32, #tpu.memory_space<vmem>>, %arg3: memref<16x32xf32, #tpu.memory_space<vmem>>, %arg4: memref<1x32xf32, #tpu.memory_space<vmem>>, %arg5: memref<32x32xf32, #tpu.memory_space<vmem>>, %arg6: memref<4x32xf32, #tpu.memory_space<vmem>>, %arg7: memref<1x32xf32, #tpu.memory_space<vmem>>, %arg8: memref<1x32xf32, #tpu.memory_space<vmem>>, %arg9: memref<1xf32, #tpu.memory_space<smem>>, %arg10: memref<8x1xf32, #tpu.memory_space<vmem>>) attributes {dimension_semantics = [#tpu.dimension_semantics<parallel>], iteration_bounds = array<i64: 1>, scalar_prefetch = 0 : i64, scratch_operands = 0 : i64, tpu.core_type = #tpu.core_type<tc>, window_params = [{transform_indices = @transform_0, window_bounds = array<i64: 8, 16>}, {transform_indices = @transform_1, window_bounds = array<i64: 8, 4>}, {pipeline_mode = #tpu.pipeline_mode<synchronous>, transform_indices = @transform_2, window_bounds = array<i64: 16, 32>}, {pipeline_mode = #tpu.pipeline_mode<synchronous>, transform_indices = @transform_3, window_bounds = array<i64: 1, 32>}, {pipeline_mode = #tpu.pipeline_mode<synchronous>, transform_indices = @transform_4, window_bounds = array<i64: 32, 32>}, {pipeline_mode = #tpu.pipeline_mode<synchronous>, transform_indices = @transform_5, window_bounds = array<i64: 4, 32>}, {pipeline_mode = #tpu.pipeline_mode<synchronous>, transform_indices = @transform_6, window_bounds = array<i64: 1, 32>}, {pipeline_mode = #tpu.pipeline_mode<synchronous>, transform_indices = @transform_7, window_bounds = array<i64: 1, 32>}, {transform_indices = @transform_8, window_bounds = array<i64: 1>}, {transform_indices = @transform_9, window_bounds = array<i64: 8, 1>}]} {
    %c0 = arith.constant 0 : index
    %c0_0 = arith.constant 0 : index
    %0 = vector.load %arg1[%c0, %c0_0] : memref<8x16xf32, #tpu.memory_space<vmem>>, vector<8x16xf32>
    %c0_1 = arith.constant 0 : index
    %c0_2 = arith.constant 0 : index
    %1 = vector.load %arg3[%c0_1, %c0_2] : memref<16x32xf32, #tpu.memory_space<vmem>>, vector<16x32xf32>
    %cst = arith.constant dense<0.000000e+00> : vector<8x32xf32>
    %2 = tpu.matmul %0, %1, %cst {dimension_numbers = #tpu.dot_dimension_numbers<[1], [0], [0], [1], [0, 0, 1, 1], [], []>} : vector<8x16xf32>, vector<16x32xf32>, vector<8x32xf32> -> vector<8x32xf32>
    %c0_3 = arith.constant 0 : index
    %c0_4 = arith.constant 0 : index
    %3 = vector.load %arg4[%c0_3, %c0_4] : memref<1x32xf32, #tpu.memory_space<vmem>>, vector<1x32xf32>
    %4 = vector.broadcast %3 : vector<1x32xf32> to vector<8x32xf32>
    %5 = arith.addf %2, %4 : vector<8x32xf32>
    %cst_5 = arith.constant 0.000000e+00 : f32
    %6 = vector.broadcast %cst_5 : f32 to vector<8x32xf32>
    %7 = arith.maximumf %5, %6 : vector<8x32xf32>
    %c0_6 = arith.constant 0 : index
    %c0_7 = arith.constant 0 : index
    %8 = vector.load %arg5[%c0_6, %c0_7] : memref<32x32xf32, #tpu.memory_space<vmem>>, vector<32x32xf32>
    %cst_8 = arith.constant dense<0.000000e+00> : vector<8x32xf32>
    %9 = tpu.matmul %7, %8, %cst_8 {dimension_numbers = #tpu.dot_dimension_numbers<[1], [0], [0], [1], [0, 0, 1, 1], [], []>} : vector<8x32xf32>, vector<32x32xf32>, vector<8x32xf32> -> vector<8x32xf32>
    %c0_9 = arith.constant 0 : index
    %c0_10 = arith.constant 0 : index
    %10 = vector.load %arg7[%c0_9, %c0_10] : memref<1x32xf32, #tpu.memory_space<vmem>>, vector<1x32xf32>
    %11 = vector.broadcast %10 : vector<1x32xf32> to vector<8x32xf32>
    %12 = arith.addf %9, %11 : vector<8x32xf32>
    %c0_11 = arith.constant 0 : index
    %c0_12 = arith.constant 0 : index
    %13 = vector.load %arg2[%c0_11, %c0_12] : memref<8x4xf32, #tpu.memory_space<vmem>>, vector<8x4xf32>
    %14 = vector.extract_strided_slice %13 {offsets = [0, 0], sizes = [8, 1], strides = [1, 1]} : vector<8x4xf32> to vector<8x1xf32>
    %c0_13 = arith.constant 0 : index
    %c0_14 = arith.constant 0 : index
    %15 = vector.load %arg6[%c0_13, %c0_14] : memref<4x32xf32, #tpu.memory_space<vmem>>, vector<1x32xf32>
    %16 = vector.broadcast %14 : vector<8x1xf32> to vector<8x32xf32>
    %17 = vector.broadcast %15 : vector<1x32xf32> to vector<8x32xf32>
    %18 = arith.mulf %16, %17 : vector<8x32xf32>
    %19 = arith.addf %12, %18 : vector<8x32xf32>
    %20 = vector.extract_strided_slice %13 {offsets = [0, 1], sizes = [8, 1], strides = [1, 1]} : vector<8x4xf32> to vector<8x1xf32>
    %c1 = arith.constant 1 : index
    %c0_15 = arith.constant 0 : index
    %21 = vector.load %arg6[%c1, %c0_15] : memref<4x32xf32, #tpu.memory_space<vmem>>, vector<1x32xf32>
    %22 = vector.broadcast %20 : vector<8x1xf32> to vector<8x32xf32>
    %23 = vector.broadcast %21 : vector<1x32xf32> to vector<8x32xf32>
    %24 = arith.mulf %22, %23 : vector<8x32xf32>
    %25 = arith.addf %19, %24 : vector<8x32xf32>
    %26 = vector.extract_strided_slice %13 {offsets = [0, 2], sizes = [8, 1], strides = [1, 1]} : vector<8x4xf32> to vector<8x1xf32>
    %c2 = arith.constant 2 : index
    %c0_16 = arith.constant 0 : index
    %27 = vector.load %arg6[%c2, %c0_16] : memref<4x32xf32, #tpu.memory_space<vmem>>, vector<1x32xf32>
    %28 = vector.broadcast %26 : vector<8x1xf32> to vector<8x32xf32>
    %29 = vector.broadcast %27 : vector<1x32xf32> to vector<8x32xf32>
    %30 = arith.mulf %28, %29 : vector<8x32xf32>
    %31 = arith.addf %25, %30 : vector<8x32xf32>
    %32 = vector.extract_strided_slice %13 {offsets = [0, 3], sizes = [8, 1], strides = [1, 1]} : vector<8x4xf32> to vector<8x1xf32>
    %c3 = arith.constant 3 : index
    %c0_17 = arith.constant 0 : index
    %33 = vector.load %arg6[%c3, %c0_17] : memref<4x32xf32, #tpu.memory_space<vmem>>, vector<1x32xf32>
    %34 = vector.broadcast %32 : vector<8x1xf32> to vector<8x32xf32>
    %35 = vector.broadcast %33 : vector<1x32xf32> to vector<8x32xf32>
    %36 = arith.mulf %34, %35 : vector<8x32xf32>
    %37 = arith.addf %31, %36 : vector<8x32xf32>
    %cst_18 = arith.constant 0.000000e+00 : f32
    %38 = vector.broadcast %cst_18 : f32 to vector<8x32xf32>
    %39 = arith.maximumf %37, %38 : vector<8x32xf32>
    %c0_19 = arith.constant 0 : index
    %c0_20 = arith.constant 0 : index
    %40 = vector.load %arg8[%c0_19, %c0_20] : memref<1x32xf32, #tpu.memory_space<vmem>>, vector<1x32xf32>
    %41 = vector.broadcast %40 : vector<1x32xf32> to vector<8x32xf32>
    %42 = arith.mulf %39, %41 : vector<8x32xf32>
    %cst_21 = arith.constant dense<0.000000e+00> : vector<8xf32>
    %43 = vector.multi_reduction <add>, %42, %cst_21 [1] : vector<8x32xf32> to vector<8xf32>
    %44 = vector.shape_cast %43 : vector<8xf32> to vector<8x1xf32>
    %c0_22 = arith.constant 0 : index
    %45 = memref.load %arg9[%c0_22] : memref<1xf32, #tpu.memory_space<smem>>
    %46 = vector.broadcast %45 : f32 to vector<8x1xf32>
    %47 = arith.addf %44, %46 : vector<8x1xf32>
    %c0_23 = arith.constant 0 : index
    %c0_24 = arith.constant 0 : index
    %48 = vector.load %arg10[%c0_23, %c0_24] : memref<8x1xf32, #tpu.memory_space<vmem>>, vector<8x1xf32>
    tpu.vector_store %arg10[%c0_23, %c0_24], %47 {strides = array<i32>} : memref<8x1xf32, #tpu.memory_space<vmem>>, vector<8x1xf32>,
    return
  }
  func.func @transform_0(%arg0: i32) -> (i32, i32) {
    %c0_i32 = arith.constant 0 : i32
    %c0_i32_0 = arith.constant 0 : i32
    return %arg0, %c0_i32 : i32, i32
  }
  func.func @transform_1(%arg0: i32) -> (i32, i32) {
    %c0_i32 = arith.constant 0 : i32
    %c0_i32_0 = arith.constant 0 : i32
    return %arg0, %c0_i32 : i32, i32
  }
  func.func @transform_2(%arg0: i32) -> (i32, i32) {
    %c0_i32 = arith.constant 0 : i32
    %c0_i32_0 = arith.constant 0 : i32
    %c0_i32_1 = arith.constant 0 : i32
    return %c0_i32, %c0_i32_0 : i32, i32
  }
  func.func @transform_3(%arg0: i32) -> (i32, i32) {
    %c0_i32 = arith.constant 0 : i32
    %c0_i32_0 = arith.constant 0 : i32
    %c0_i32_1 = arith.constant 0 : i32
    return %c0_i32, %c0_i32_0 : i32, i32
  }
  func.func @transform_4(%arg0: i32) -> (i32, i32) {
    %c0_i32 = arith.constant 0 : i32
    %c0_i32_0 = arith.constant 0 : i32
    %c0_i32_1 = arith.constant 0 : i32
    return %c0_i32, %c0_i32_0 : i32, i32
  }
  func.func @transform_5(%arg0: i32) -> (i32, i32) {
    %c0_i32 = arith.constant 0 : i32
    %c0_i32_0 = arith.constant 0 : i32
    %c0_i32_1 = arith.constant 0 : i32
    return %c0_i32, %c0_i32_0 : i32, i32
  }
  func.func @transform_6(%arg0: i32) -> (i32, i32) {
    %c0_i32 = arith.constant 0 : i32
    %c0_i32_0 = arith.constant 0 : i32
    %c0_i32_1 = arith.constant 0 : i32
    return %c0_i32, %c0_i32_0 : i32, i32
  }
  func.func @transform_7(%arg0: i32) -> (i32, i32) {
    %c0_i32 = arith.constant 0 : i32
    %c0_i32_0 = arith.constant 0 : i32
    %c0_i32_1 = arith.constant 0 : i32
    return %c0_i32, %c0_i32_0 : i32, i32
  }
  func.func @transform_8(%arg0: i32) -> i32 {
    %c0_i32 = arith.constant 0 : i32
    %c0_i32_0 = arith.constant 0 : i32
    return %c0_i32 : i32
  }
  func.func @transform_9(%arg0: i32) -> (i32, i32) {
    %c0_i32 = arith.constant 0 : i32
    %c0_i32_0 = arith.constant 0 : i32
    return %arg0, %c0_i32 : i32, i32
  }
}

</mosaic_0001>

<llo_original>
// kernel: tpu_custom_call.1
$region0: #{tpu_custom_call.1}
  #allocation0 [shape = 'u32[]', space=smem, size = 0x4, offset = 0x4, fixed_abs, tag = 'smem constant byte address 0x4 - core index']
  #allocation1 [shape = 'u32[72,128]{1,0:T(1,128)}', space=vmem, size = 0x9000, scoped, tag = 'internal scratch']
  #allocation2 [shape = 'f32[1]{0:T(128)S(6)}', space=smem, size = 0x200, scoped, tag = 'scoped memory for tpu_custom_call.1']
  %s0 = inlined_call_operand.vmem [shape: f32[8,16], index: 0, kind: input, shape index: {}]
  %s1 = inlined_call_operand.vmem [shape: f32[8,4], index: 1, kind: input, shape index: {}]
  %s2 = inlined_call_operand.hbm [shape: f32[16,32], index: 2, kind: input, shape index: {}]
  %s3 = inlined_call_operand.vmem [shape: f32[1,32], index: 3, kind: input, shape index: {}]
  %s4 = inlined_call_operand.hbm [shape: f32[32,32], index: 4, kind: input, shape index: {}]
  %s5 = inlined_call_operand.vmem [shape: f32[4,32], index: 5, kind: input, shape index: {}]
  %s6 = inlined_call_operand.vmem [shape: f32[1,32], index: 6, kind: input, shape index: {}]
  %s7 = inlined_call_operand.vmem [shape: f32[1,32], index: 7, kind: input, shape index: {}]
  %s8 = inlined_call_operand.<no memory space> [shape: f32[1], index: 8, kind: input, shape index: {}]
  %s9 = inlined_call_operand.vmem [shape: f32[8,1], index: 9, kind: output, shape index: {}]
  %s10 = sld [smem:[#allocation0]]
  $region54: #{tpu_custom_call.1} parent=0
    _
  %s12 = ssub.s32 1, %s10
  %s13 = scalar_select 0, %s12, %s10
  %14 = sst [smem:[#allocation2]] %s8
  $region1: #{tpu_custom_call.1} parent=0
    #allocation3 [shape = 'u8[8192]{0}', space=vmem, size = 0x2000, scoped, tag = 'input window, operand 2, single buffered']
    #allocation4 [shape = 's32[1]{0}', space=sflag, size = 0x4, scoped, tag = 'scoped memory for tpu_custom_call.1']
    #allocation5 [shape = 'u8[16384]{0}', space=vmem, size = 0x4000, scoped, tag = 'input window, operand 4, single buffered']
    #allocation6 [shape = 's32[1]{0}', space=sflag, size = 0x4, scoped, tag = 'scoped memory for tpu_custom_call.1']
    %15 = vsyncpa [#allocation4], 0
    %16 = vsyncpa [#allocation6], 0
    // Predicated region
    $region2: #{tpu_custom_call.1} parent=1 // pred_check
      _
    $region3: #{tpu_custom_call.1} parent=1 // pred_check_branch
      %18 = sbr.rel (0) target = $region5
    $region4: #{tpu_custom_call.1} parent=1 // pred_region
      _
    $region5: #{tpu_custom_call.1} parent=1 // pred_fallthru
      _
    // Predicated region
    $region6: #{tpu_custom_call.1} parent=1 // pred_check
      _
    $region7: #{tpu_custom_call.1} parent=1 // pred_check_branch
      %20 = sbr.rel (0) target = $region9
    $region8: #{tpu_custom_call.1} parent=1 // pred_region
      _
    $region9: #{tpu_custom_call.1} parent=1 // pred_fallthru
      _
    // Predicated region
    $region10: #{tpu_custom_call.1} parent=1 // pred_check
      _
    $region11: #{tpu_custom_call.1} parent=1 // pred_check_branch
      %22 = sbr.rel (0) target = $region13
    $region12: #{tpu_custom_call.1} parent=1 // pred_region
      %24 = vsyncadd [#allocation4], 0
      %s25 = sshll.u32 %s2, 4
      %s26 = int_to_ptr.hbm [resolvable:$true] %s25
      %s27 = sshll.u32 [#allocation3], 4
      %s28 = int_to_ptr.vmem [resolvable:$true] %s27
      %33 = dma.hbm_to_vmem [thread:$0]  %s26, 256, %s28, [#allocation4], 128, 128, 8
    $region13: #{tpu_custom_call.1} parent=1 // pred_fallthru
      _
    // Predicated region
    $region14: #{tpu_custom_call.1} parent=1 // pred_check
      _
    $region15: #{tpu_custom_call.1} parent=1 // pred_check_branch
      %35 = sbr.rel (0) target = $region17
    $region16: #{tpu_custom_call.1} parent=1 // pred_region
      _
    $region17: #{tpu_custom_call.1} parent=1 // pred_fallthru
      _
    // Predicated region
    $region18: #{tpu_custom_call.1} parent=1 // pred_check
      _
    $region19: #{tpu_custom_call.1} parent=1 // pred_check_branch
      %37 = sbr.rel (0) target = $region21
    $region20: #{tpu_custom_call.1} parent=1 // pred_region
      %39 = vsyncadd [#allocation6], 0
      %s40 = sshll.u32 %s4, 4
      %s41 = int_to_ptr.hbm [resolvable:$true] %s40
      %s42 = sshll.u32 [#allocation5], 4
      %s43 = int_to_ptr.vmem [resolvable:$true] %s42
      %48 = dma.hbm_to_vmem [thread:$0]  %s41, 512, %s43, [#allocation6], 128, 128, 8
    $region21: #{tpu_custom_call.1} parent=1 // pred_fallthru
      _
    // Predicated region
    $region22: #{tpu_custom_call.1} parent=1 // pred_check
      _
    $region23: #{tpu_custom_call.1} parent=1 // pred_check_branch
      %50 = sbr.rel (0) target = $region25
    $region24: #{tpu_custom_call.1} parent=1 // pred_region
      _
    $region25: #{tpu_custom_call.1} parent=1 // pred_fallthru
      _
    // Predicated region
    $region26: #{tpu_custom_call.1} parent=1 // pred_check
      _
    $region27: #{tpu_custom_call.1} parent=1 // pred_check_branch
      %52 = sbr.rel (0) target = $region29
    $region28: #{tpu_custom_call.1} parent=1 // pred_region
      _
    $region29: #{tpu_custom_call.1} parent=1 // pred_fallthru
      _
    // Predicated region
    $region30: #{tpu_custom_call.1} parent=1 // pred_check
      _
    $region31: #{tpu_custom_call.1} parent=1 // pred_check_branch
      %54 = sbr.rel (0) target = $region33
    $region32: #{tpu_custom_call.1} parent=1 // pred_region
      _
    $region33: #{tpu_custom_call.1} parent=1 // pred_fallthru
      _
    // Predicated region
    $region34: #{tpu_custom_call.1} parent=1 // pred_check
      _
    $region35: #{tpu_custom_call.1} parent=1 // pred_check_branch
      %56 = sbr.rel (0) target = $region37
    $region36: #{tpu_custom_call.1} parent=1 // pred_region
      _
    $region37: #{tpu_custom_call.1} parent=1 // pred_fallthru
      _
    // Predicated region
    $region38: #{tpu_custom_call.1} parent=1 // pred_check
      _
    $region39: #{tpu_custom_call.1} parent=1 // pred_check_branch
      %58 = sbr.rel (0) target = $region41
    $region40: #{tpu_custom_call.1} parent=1 // pred_region
      %60 = dma.done [#allocation4], 256
    $region41: #{tpu_custom_call.1} parent=1 // pred_fallthru
      _
    // Predicated region
    $region42: #{tpu_custom_call.1} parent=1 // pred_check
      _
    $region43: #{tpu_custom_call.1} parent=1 // pred_check_branch
      %62 = sbr.rel (0) target = $region45
    $region44: #{tpu_custom_call.1} parent=1 // pred_region
      %64 = dma.done [#allocation6], 512
    $region45: #{tpu_custom_call.1} parent=1 // pred_fallthru
      _
    %v65 = vld [vmem:[%s0] sm:$0xff]
    %v66 = vld [vmem:[#allocation3] sm:$0xff]
    %v67 = vld [vmem:[#allocation3 + $0x8] sm:$0xff]
    %v68 = vld [vmem:[%s3] sm:$0x1]
    %v70 = vperm.slane %v68, 0
    %vm72 = vcmask 130048
    %v74 = vsel %vm72, %v65, 0
    %76 = vmatpush.msra.mxu0 0.0
    %77 = vmatpush.msra.mxu0 0.0
    %78 = vmatpush.msra.mxu0 0.0
    %79 = vmatpush.msra.mxu0 0.0
    %80 = vmatpush.msra.mxu0 0.0
    %81 = vmatpush.msra.mxu0 0.0
    %82 = vmatpush.msra.mxu0 0.0
    %83 = vmatpush.msra.mxu0 0.0
    %84 = vmatpush.msra.mxu0 0.0
    %85 = vmatpush.msra.mxu0 0.0
    %86 = vmatpush.msra.mxu0 0.0
    %87 = vmatpush.msra.mxu0 0.0
    %88 = vmatpush.msra.mxu0 0.0
    %89 = vmatpush.msra.mxu0 0.0
    %90 = vmatpush.msra.mxu0 %v67
    %91 = vmatpush.msra.mxu0 %v66
    %92 = vmatmul.f32.gmra.mxu0 %v74
    %v93 = vpop.f32.mrf.mxu0
    %v94 = vadd.f32 %v70, %v93
    %95 = vdwg.mxu0
    %v96 = vmax.f32 %v94, 0.0
    %v97 = vld [vmem:[#allocation5] sm:$0xff]
    %v98 = vld [vmem:[#allocation5 + $0x8] sm:$0xff]
    %v99 = vld [vmem:[#allocation5 + $0x10] sm:$0xff]
    %v100 = vld [vmem:[#allocation5 + $0x18] sm:$0xff]
    %v101 = vld [vmem:[%s6] sm:$0x1]
    %v103 = vperm.slane %v101, 0
    %vm105 = vcmask 261120
    %v107 = vsel %vm105, %v96, 0
    %109 = vmatpush.msra.mxu0 0.0
    %110 = vmatpush.msra.mxu0 0.0
    %111 = vmatpush.msra.mxu0 0.0
    %112 = vmatpush.msra.mxu0 0.0
    %113 = vmatpush.msra.mxu0 0.0
    %114 = vmatpush.msra.mxu0 0.0
    %115 = vmatpush.msra.mxu0 0.0
    %116 = vmatpush.msra.mxu0 0.0
    %117 = vmatpush.msra.mxu0 0.0
    %118 = vmatpush.msra.mxu0 0.0
    %119 = vmatpush.msra.mxu0 0.0
    %120 = vmatpush.msra.mxu0 0.0
    %121 = vmatpush.msra.mxu0 %v100
    %122 = vmatpush.msra.mxu0 %v99
    %123 = vmatpush.msra.mxu0 %v98
    %124 = vmatpush.msra.mxu0 %v97
    %125 = vmatmul.f32.gmra.mxu0 %v107
    %v126 = vpop.f32.mrf.mxu0
    %v127 = vadd.f32 %v103, %v126
    %128 = vdwg.mxu0
    %v129 = vld [vmem:[%s1] sm:$0xff]
    %v130 = vld [vmem:[%s5] sm:$0x1]
    %132 = vset.pattern.permute.xlu0 0
    %133 = vperm.xlu0 %132, %v129
    %v134 = vpop.permute.xlu0 %133
    %v136 = vperm.slane %v130, 0
    %v137 = vmul.f32 %v134, %v136
    %v138 = vadd.f32 %v127, %v137
    %v139 = vld [vmem:[%s5 + $0x1] sm:$0x1]
    %140 = vset.pattern.permute.xlu0 1
    %141 = vperm.xlu0 %140, %v129
    %v142 = vpop.permute.xlu0 %141
    %v144 = vperm.slane %v139, 0
    %v145 = vmul.f32 %v142, %v144
    %v146 = vadd.f32 %v138, %v145
    %v147 = vld [vmem:[%s5 + $0x2] sm:$0x1]
    %148 = vset.pattern.permute.xlu0 2
    %149 = vperm.xlu0 %148, %v129
    %v150 = vpop.permute.xlu0 %149
    %v152 = vperm.slane %v147, 0
    %v153 = vmul.f32 %v150, %v152
    %v154 = vadd.f32 %v146, %v153
    %v155 = vld [vmem:[%s5 + $0x3] sm:$0x1]
    %156 = vset.pattern.permute.xlu0 3
    %157 = vperm.xlu0 %156, %v129
    %v158 = vpop.permute.xlu0 %157
    %v160 = vperm.slane %v155, 0
    %v161 = vmul.f32 %v158, %v160
    %v162 = vadd.f32 %v154, %v161
    %v163 = vmax.f32 %v162, 0.0
    %v164 = vld [vmem:[%s7] sm:$0x1]
    %v166 = vperm.slane %v164, 0
    %v168 = vmul.f32 %v163, %v166
    %v169 = vsel %vm105, %v168, 0.0
    %170 = vadd.xlane.f32.xlu0 %v169
    %v171 = vpop.xlane.xlu0 %170
    %s172 = sld [smem:[#allocation2]]
    %v173 = vstv %s172
    %v174 = vadd.f32 %v171, %v173
    %vm175 = vcmask 7168
    %176 = vst.msk [vmem:[%s9] sm:$0xff] %vm175, %v174
    // Predicated region
    $region46: #{tpu_custom_call.1} parent=1 // pred_check
      _
    $region47: #{tpu_custom_call.1} parent=1 // pred_check_branch
      %178 = sbr.rel (0) target = $region49
    $region48: #{tpu_custom_call.1} parent=1 // pred_region
      _
    $region49: #{tpu_custom_call.1} parent=1 // pred_fallthru
      _
    // Predicated region
    $region50: #{tpu_custom_call.1} parent=1 // pred_check
      _
    $region51: #{tpu_custom_call.1} parent=1 // pred_check_branch
      %180 = sbr.rel (0) target = $region53
    $region52: #{tpu_custom_call.1} parent=1 // pred_region
      _
    $region53: #{tpu_custom_call.1} parent=1 // pred_fallthru
      _
    %181 = vsyncpa [#allocation4], 1
    %182 = vsyncpa [#allocation6], 1

</llo_original>
